<compile_context>
chip_gen: v5e
topology: v5e:2x2
jax: 0.10.0
libtpu: 0.0.40
codegen_flags: <defaults>
</compile_context>

<pallas_src>
import functools

import jax
import jax.numpy as jnp
from jax.experimental import pallas as pl
from jax.experimental.pallas import tpu as pltpu


# ---------------------------------------------------------------------------
# Pallas kernel: fused 1x1 conv (+ folded BN affine) (+ optional ReLU),
# lane-dense (C, M) orientation: (Cout, Cin) @ (Cin, TM).
# ---------------------------------------------------------------------------
def _upblock_kernel(x_ref, w_ref, s_ref, o_ref, *, apply_relu):
    # x_ref: (Cin, TM)   lane-dense pixel tile of one batch element
    # w_ref: (Cout, Cin) conv weight with BN scale folded in
    # s_ref: (Cout, 1)   folded shift = beta - mean*scale + bias*scale
    # o_ref: (Cout, TM)
    x = x_ref[...]
    w = w_ref[...]
    cin = x.shape[0]
    if cin <= 8:
        # Tiny contraction: Cin broadcast multiply-adds on the VPU.  Keeps
        # everything lane-dense and avoids MXU push/pop for a K=4 matmul.
        acc = w[:, 0:1] * x[0:1, :]
        for c in range(1, cin):
            acc = acc + w[:, c:c + 1] * x[c:c + 1, :]
    else:
        acc = jnp.dot(w, x, preferred_element_type=jnp.float32)
    y = acc + s_ref[...]                     # per-channel shift (lane broadcast)
    if apply_relu:
        y = jnp.maximum(y, 0.0)
    o_ref[...] = y.astype(o_ref.dtype)


def _fused_conv_bn(x3d, w_scaled, shift, *, apply_relu, tile_m=512):
    """x3d: (N, Cin, M) -> (N, Cout, M).  M = H*W stays on the lane axis."""
    n, cin, m = x3d.shape
    cout = w_scaled.shape[0]

    # Lane-dense tile along M; no host-side padding (ragged last block is
    # handled by Pallas).  Keep >= 2 grid steps when possible so both
    # TensorCores on v7x get work.
    tm = min(tile_m, m)                       # either 128-multiple or == m
    if n * pl.cdiv(m, tm) < 2 and m >= 256:
        tm = min(m, ((m // 2 + 127) // 128) * 128)

    grid = (n, pl.cdiv(m, tm))
    kernel = functools.partial(_upblock_kernel, apply_relu=apply_relu)
    return pl.pallas_call(
        kernel,
        out_shape=jax.ShapeDtypeStruct((n, cout, m), x3d.dtype),
        grid_spec=pltpu.PrefetchScalarGridSpec(
            num_scalar_prefetch=0,
            grid=grid,
            in_specs=[
                pl.BlockSpec((None, cin, tm), lambda b, i: (b, 0, i)),  # x tile
                pl.BlockSpec((cout, cin), lambda b, i: (0, 0)),         # weight
                pl.BlockSpec((cout, 1), lambda b, i: (0, 0)),           # shift
            ],
            out_specs=pl.BlockSpec((None, cout, tm), lambda b, i: (b, 0, i)),
        ),
        compiler_params=pltpu.CompilerParams(
            dimension_semantics=("parallel", "parallel"),
            # Tiles here are tiny (<< 1 MiB); 32 MiB is safe on v5e/v6e/v7x.
            vmem_limit_bytes=32 * 1024 * 1024,
        ),
    )(x3d, w_scaled, shift)


# ---------------------------------------------------------------------------
# Bilinear 2x upsample, align_corners=True (separable, spatial axis kept last)
# ---------------------------------------------------------------------------
def _interp_matrix(out_size, in_size):
    if in_size == 1:
        return jnp.ones((out_size, 1), jnp.float32)
    pos = jnp.arange(out_size, dtype=jnp.float32) * (in_size - 1) / (out_size - 1)
    lo = jnp.clip(jnp.floor(pos).astype(jnp.int32), 0, in_size - 2)
    frac = pos - lo.astype(jnp.float32)
    rows = jnp.arange(out_size)
    a = jnp.zeros((out_size, in_size), jnp.float32)
    a = a.at[rows, lo].set(1.0 - frac)
    a = a.at[rows, lo + 1].add(frac)
    return a


def _bilinear_upsample_2x(x_nchw):
    n, c, h, w = x_nchw.shape
    a_h = _interp_matrix(2 * h, h)          # (2H, H)
    a_w = _interp_matrix(2 * w, w)          # (2W, W)
    # Interpolate along W: contract the last (lane) axis, output lane axis = 2W.
    y = jnp.matmul(x_nchw.reshape(n * c * h, w), a_w.T)        # (N*C*H, 2W)
    y = y.reshape(n * c, h, 2 * w)
    # Interpolate along H: batched matmul over N*C, spatial axis stays last.
    y = jnp.einsum("ph,bhq->bpq", a_h, y)                      # (N*C, 2H, 2W)
    return y.reshape(n, c, 2 * h, 2 * w)


# ---------------------------------------------------------------------------
# UpBlock forward
# ---------------------------------------------------------------------------
def upblock_forward(x_nchw, params, *, upsample=False, eps=1e-5):
    """x_nchw: (N, Cin, H, W) float32.  Returns (N, Cout, H', W')."""
    n, cin, h, w = x_nchw.shape
    w_conv = params["conv_w"].reshape(params["conv_w"].shape[0], cin)  # (Cout, Cin)
    cout = w_conv.shape[0]

    # Fold BatchNorm (inference, running stats) + conv bias:
    #   y = scale * (W x + b) + (beta - mean*scale) = (scale*W) x + shift
    scale = params["bn_gamma"] / jnp.sqrt(params["bn_var"] + eps)       # (Cout,)
    w_scaled = (w_conv * scale[:, None]).astype(jnp.float32)            # (Cout, Cin)
    shift = (params["bn_beta"] - params["bn_mean"] * scale
             + params["conv_b"] * scale).reshape(cout, 1).astype(jnp.float32)

    x3d = x_nchw.astype(jnp.float32).reshape(n, cin, h * w)   # native NCHW, free reshape

    if upsample:
        # Conv+BN (linear + per-channel bias) commute exactly with bilinear
        # interpolation (rows sum to 1), so run the fused matmul on the small
        # pre-upsample tensor; ReLU must come after the upsample.
        y = _fused_conv_bn(x3d, w_scaled, shift, apply_relu=False)
        y = y.reshape(n, cout, h, w)
        y = _bilinear_upsample_2x(y)
        return jnp.maximum(y, 0.0)

    y = _fused_conv_bn(x3d, w_scaled, shift, apply_relu=True)
    return y.reshape(n, cout, h, w)


# ---------------------------------------------------------------------------
# Deterministic parameter construction (shapes match nn.Conv2d / nn.BatchNorm2d)
# ---------------------------------------------------------------------------
def init_upblock_params(key, inplanes, planes):
    k_w, k_b, k_g, k_be, k_m, k_v = jax.random.split(key, 6)
    return {
        "conv_w": 0.1 * jax.random.normal(k_w, (planes, inplanes, 1, 1), jnp.float32),
        "conv_b": 0.1 * jax.random.normal(k_b, (planes,), jnp.float32),
        "bn_gamma": 1.0 + 0.1 * jax.random.normal(k_g, (planes,), jnp.float32),
        "bn_beta": 0.1 * jax.random.normal(k_be, (planes,), jnp.float32),
        "bn_mean": 0.1 * jax.random.normal(k_m, (planes,), jnp.float32),
        "bn_var": 1.0 + 0.1 * jax.random.uniform(k_v, (planes,), jnp.float32),
    }


# Pure-JAX reference in the ORIGINAL module ordering (upsample -> conv -> bn -> relu)
def _reference_forward(x_nchw, params, *, upsample=False, eps=1e-5):
    if upsample:
        x_nchw = _bilinear_upsample_2x(x_nchw)
    cout, cin = params["conv_w"].shape[:2]
    y = jnp.einsum("nchw,oc->nohw", x_nchw, params["conv_w"].reshape(cout, cin))
    y = y + params["conv_b"][None, :, None, None]
    scale = params["bn_gamma"] / jnp.sqrt(params["bn_var"] + eps)
    shift = params["bn_beta"] - params["bn_mean"] * scale
    y = y * scale[None, :, None, None] + shift[None, :, None, None]
    return jnp.maximum(y, 0.0)


if __name__ == "__main__":
    key = jax.random.PRNGKey(0)
    k_x, k_p = jax.random.split(key)

    # Small shapes consistent with the module: N=2, Cin=4, H=W=16, Cout=8.
    N, CIN, H, W, COUT = 2, 4, 16, 16, 8
    x = jax.random.normal(k_x, (N, CIN, H, W), jnp.float32)
    params = init_upblock_params(k_p, CIN, COUT)

    # upsample=True path (conv before upsample, ReLU after)
    fwd_up = jax.jit(functools.partial(upblock_forward, upsample=True))
    out_up = jax.block_until_ready(fwd_up(x, params))
    assert out_up.shape == (N, COUT, 2 * H, 2 * W), out_up.shape
    ref_up = _reference_forward(x, params, upsample=True)
    assert jnp.allclose(out_up, ref_up, atol=1e-5, rtol=1e-5), "mismatch (upsample=True)"

    # upsample=False path (ReLU fused in the kernel)
    fwd = jax.jit(functools.partial(upblock_forward, upsample=False))
    out = jax.block_until_ready(fwd(x, params))
    assert out.shape == (N, COUT, H, W), out.shape
    ref = _reference_forward(x, params, upsample=False)
    assert jnp.allclose(out, ref, atol=1e-5, rtol=1e-5), "mismatch (upsample=False)"

    print("KERNEL_OK")
</pallas_src>

<mosaic_0001>
module attributes {stable_mosaic.version = 11 : i64} {
  func.func @_upblock_kernel(%arg0: i32, %arg1: i32, %arg2: memref<1x4x256xf32, #tpu.memory_space<vmem>>, %arg3: memref<8x4xf32, #tpu.memory_space<vmem>>, %arg4: memref<8x1xf32, #tpu.memory_space<vmem>>, %arg5: memref<1x8x256xf32, #tpu.memory_space<vmem>>) attributes {dimension_semantics = [#tpu.dimension_semantics<parallel>, #tpu.dimension_semantics<parallel>], iteration_bounds = array<i64: 2, 1>, scalar_prefetch = 0 : i64, scratch_operands = 0 : i64, tpu.core_type = #tpu.core_type<tc>, window_params = [{transform_indices = @transform_0, window_bounds = array<i64: 1, 4, 256>}, {pipeline_mode = #tpu.pipeline_mode<synchronous>, transform_indices = @transform_1, window_bounds = array<i64: 8, 4>}, {pipeline_mode = #tpu.pipeline_mode<synchronous>, transform_indices = @transform_2, window_bounds = array<i64: 8, 1>}, {transform_indices = @transform_3, window_bounds = array<i64: 1, 8, 256>}]} {
    %c0 = arith.constant 0 : index
    %c0_0 = arith.constant 0 : index
    %c0_1 = arith.constant 0 : index
    %0 = vector.load %arg2[%c0, %c0_0, %c0_1] : memref<1x4x256xf32, #tpu.memory_space<vmem>>, vector<1x4x256xf32>
    %1 = vector.shape_cast %0 : vector<1x4x256xf32> to vector<4x256xf32>
    %c0_2 = arith.constant 0 : index
    %c0_3 = arith.constant 0 : index
    %2 = vector.load %arg3[%c0_2, %c0_3] : memref<8x4xf32, #tpu.memory_space<vmem>>, vector<8x4xf32>
    %3 = vector.extract_strided_slice %2 {offsets = [0, 0], sizes = [8, 1], strides = [1, 1]} : vector<8x4xf32> to vector<8x1xf32>
    %4 = vector.extract_strided_slice %1 {offsets = [0, 0], sizes = [1, 256], strides = [1, 1]} : vector<4x256xf32> to vector<1x256xf32>
    %5 = vector.broadcast %3 : vector<8x1xf32> to vector<8x256xf32>
    %6 = vector.broadcast %4 : vector<1x256xf32> to vector<8x256xf32>
    %7 = arith.mulf %5, %6 : vector<8x256xf32>
    %8 = vector.extract_strided_slice %2 {offsets = [0, 1], sizes = [8, 1], strides = [1, 1]} : vector<8x4xf32> to vector<8x1xf32>
    %9 = vector.extract_strided_slice %1 {offsets = [1, 0], sizes = [1, 256], strides = [1, 1]} : vector<4x256xf32> to vector<1x256xf32>
    %10 = vector.broadcast %8 : vector<8x1xf32> to vector<8x256xf32>
    %11 = vector.broadcast %9 : vector<1x256xf32> to vector<8x256xf32>
    %12 = arith.mulf %10, %11 : vector<8x256xf32>
    %13 = arith.addf %7, %12 : vector<8x256xf32>
    %14 = vector.extract_strided_slice %2 {offsets = [0, 2], sizes = [8, 1], strides = [1, 1]} : vector<8x4xf32> to vector<8x1xf32>
    %15 = vector.extract_strided_slice %1 {offsets = [2, 0], sizes = [1, 256], strides = [1, 1]} : vector<4x256xf32> to vector<1x256xf32>
    %16 = vector.broadcast %14 : vector<8x1xf32> to vector<8x256xf32>
    %17 = vector.broadcast %15 : vector<1x256xf32> to vector<8x256xf32>
    %18 = arith.mulf %16, %17 : vector<8x256xf32>
    %19 = arith.addf %13, %18 : vector<8x256xf32>
    %20 = vector.extract_strided_slice %2 {offsets = [0, 3], sizes = [8, 1], strides = [1, 1]} : vector<8x4xf32> to vector<8x1xf32>
    %21 = vector.extract_strided_slice %1 {offsets = [3, 0], sizes = [1, 256], strides = [1, 1]} : vector<4x256xf32> to vector<1x256xf32>
    %22 = vector.broadcast %20 : vector<8x1xf32> to vector<8x256xf32>
    %23 = vector.broadcast %21 : vector<1x256xf32> to vector<8x256xf32>
    %24 = arith.mulf %22, %23 : vector<8x256xf32>
    %25 = arith.addf %19, %24 : vector<8x256xf32>
    %c0_4 = arith.constant 0 : index
    %c0_5 = arith.constant 0 : index
    %26 = vector.load %arg4[%c0_4, %c0_5] : memref<8x1xf32, #tpu.memory_space<vmem>>, vector<8x1xf32>
    %27 = vector.broadcast %26 : vector<8x1xf32> to vector<8x256xf32>
    %28 = arith.addf %25, %27 : vector<8x256xf32>
    %c0_6 = arith.constant 0 : index
    %c0_7 = arith.constant 0 : index
    %c0_8 = arith.constant 0 : index
    %29 = vector.load %arg5[%c0_6, %c0_7, %c0_8] : memref<1x8x256xf32, #tpu.memory_space<vmem>>, vector<1x8x256xf32>
    %30 = vector.shape_cast %29 : vector<1x8x256xf32> to vector<8x256xf32>
    %31 = vector.shape_cast %28 : vector<8x256xf32> to vector<1x8x256xf32>
    tpu.vector_store %arg5[%c0_6, %c0_7, %c0_8], %31 {strides = array<i32>} : memref<1x8x256xf32, #tpu.memory_space<vmem>>, vector<1x8x256xf32>,
    return
  }
  func.func @transform_0(%arg0: i32, %arg1: i32) -> (i32, i32, i32) {
    %c0_i32 = arith.constant 0 : i32
    %c0_i32_0 = arith.constant 0 : i32
    return %arg0, %c0_i32, %arg1 : i32, i32, i32
  }
  func.func @transform_1(%arg0: i32, %arg1: i32) -> (i32, i32) {
    %c0_i32 = arith.constant 0 : i32
    %c0_i32_0 = arith.constant 0 : i32
    %c0_i32_1 = arith.constant 0 : i32
    return %c0_i32, %c0_i32_0 : i32, i32
  }
  func.func @transform_2(%arg0: i32, %arg1: i32) -> (i32, i32) {
    %c0_i32 = arith.constant 0 : i32
    %c0_i32_0 = arith.constant 0 : i32
    %c0_i32_1 = arith.constant 0 : i32
    return %c0_i32, %c0_i32_0 : i32, i32
  }
  func.func @transform_3(%arg0: i32, %arg1: i32) -> (i32, i32, i32) {
    %c0_i32 = arith.constant 0 : i32
    %c0_i32_0 = arith.constant 0 : i32
    return %arg0, %c0_i32, %arg1 : i32, i32, i32
  }
}

</mosaic_0001>

<llo_original>
// kernel: upblock_forward.1
$region0: #{upblock_forward.1}
  #allocation0 [shape = 'u32[]', space=smem, size = 0x4, offset = 0x4, fixed_abs, tag = 'smem constant byte address 0x4 - core index']
  #allocation1 [shape = 'u32[72,128]{1,0:T(1,128)}', space=vmem, size = 0x9000, scoped, tag = 'internal scratch']
  %s0 = inlined_call_operand.vmem [shape: f32[2,4,256], index: 0, kind: input, shape index: {}]
  %s1 = inlined_call_operand.vmem [shape: f32[8,4], index: 1, kind: input, shape index: {}]
  %s2 = inlined_call_operand.vmem [shape: f32[8,1], index: 2, kind: input, shape index: {}]
  %s3 = inlined_call_operand.vmem [shape: f32[2,8,256], index: 3, kind: output, shape index: {}]
  %s4 = sld [smem:[#allocation0]]
  $region45: #{upblock_forward.1} parent=0
    _
  %s6 = ssub.s32 1, %s4
  %s7 = scalar_select 0, %s6, %s4
  loop: start=0, step=1, limit=4
  $region2: #{upblock_forward.1} parent=0 // loop_pre_header
    _
  $region3: #{upblock_forward.1} parent=0 // loop_header
    %s9 = sphi 0, %s13
    %p10 = scmp.ge.s32.totalorder %s9, 4
    %s16 = sphi 0, %s28
    %s17 = sphi 0, %s24
    %s18 = sphi 0, %s16
    %s19 = sphi 0, %s17
    %s20 = sphi 0, %s18
    %s21 = sphi 0, %s19
    %s33 = sphi 0, %s35
    %s36 = sphi 0, %s33
    %s37 = sphi 0, %s36
    %s53 = sphi 0, %s37
    %s57 = sphi 0, %s57
    %s59 = sphi 0, %s57
    %s60 = sphi 0, %s59
    %s74 = sphi 0, %s60
    %s78 = sphi 0, %s78
    %s80 = sphi 0, %s78
    %s81 = sphi 0, %s80
    %s95 = sphi 0, %s81
    %s103 = sphi 0, %s105
    %s106 = sphi 0, %s103
    %s107 = sphi 0, %s106
    %s123 = sphi 0, %s107
  $region4: #{upblock_forward.1} parent=0 // loop_header_branch
    %12 = sbr.rel (%p10) target = $region8
  $region5: #{upblock_forward.1} parent=0 // loop_body
    %s14 = ssub.s32 %s9, 1
    %s15 = ssub.s32 %s9, 2
    %s22 = sadd.s32 1, %s17
    %p23 = scmp.ge.s32.totalorder %s22, 1
    %s24 = scalar_select %p23, 0, %s22
    %s25 = sadd.s32 1, %s16
    %s26 = scalar_select %p23, %s25, %s16
    %p27 = scmp.ge.s32.totalorder %s26, 2
    %s28 = scalar_select %p27, 0, %s26
    %s29 = ssub.s32 %s16, %s28
    %s30 = ssub.s32 %s17, %s24
    %s31 = sor.u32 %s29, %s30
    %p32 = scmp.eq.s32.totalorder %s31, 0
    %s34 = sadd.s32 %s33, 1
    %s35 = scalar_select %p32, %s33, %s34
    %p38 = pneg %p32
    %p39 = scmp.eq.s32.totalorder %s9, 1
    %p40 = por %p38, %p39
    %p41 = scmp.ne.s32.totalorder %s33, %s36
    %p42 = scmp.eq.s32.totalorder %s9, 0
    %p43 = por %p41, %p42
    %p44 = scmp.ne.s32.totalorder %s33, %s36
    %p45 = scmp.eq.s32.totalorder %s14, 1
    %p46 = por %p44, %p45
    %p47 = scmp.ne.s32.totalorder %s36, %s37
    %p48 = scmp.eq.s32.totalorder %s14, 0
    %p49 = por %p47, %p48
    %p50 = scmp.ne.s32.totalorder %s36, %s37
    %p51 = scmp.eq.s32.totalorder %s15, 1
    %p52 = por %p50, %p51
    %p54 = scmp.ne.s32.totalorder %s37, %s53
    %p55 = scmp.eq.s32.totalorder %s15, 0
    %p56 = por %p54, %p55
    %s58 = sadd.s32 %s57, 1
    %p61 = scmp.eq.s32.totalorder %s9, 1
    %p62 = scmp.ne.s32.totalorder %s57, %s59
    %p63 = scmp.eq.s32.totalorder %s9, 0
    %p64 = por %p62, %p63
    %p65 = scmp.ne.s32.totalorder %s57, %s59
    %p66 = scmp.eq.s32.totalorder %s14, 1
    %p67 = por %p65, %p66
    %p68 = scmp.ne.s32.totalorder %s59, %s60
    %p69 = scmp.eq.s32.totalorder %s14, 0
    %p70 = por %p68, %p69
    %p71 = scmp.ne.s32.totalorder %s59, %s60
    %p72 = scmp.eq.s32.totalorder %s15, 1
    %p73 = por %p71, %p72
    %p75 = scmp.ne.s32.totalorder %s60, %s74
    %p76 = scmp.eq.s32.totalorder %s15, 0
    %p77 = por %p75, %p76
    %s79 = sadd.s32 %s78, 1
    %p82 = scmp.eq.s32.totalorder %s9, 1
    %p83 = scmp.ne.s32.totalorder %s78, %s80
    %p84 = scmp.eq.s32.totalorder %s9, 0
    %p85 = por %p83, %p84
    %p86 = scmp.ne.s32.totalorder %s78, %s80
    %p87 = scmp.eq.s32.totalorder %s14, 1
    %p88 = por %p86, %p87
    %p89 = scmp.ne.s32.totalorder %s80, %s81
    %p90 = scmp.eq.s32.totalorder %s14, 0
    %p91 = por %p89, %p90
    %p92 = scmp.ne.s32.totalorder %s80, %s81
    %p93 = scmp.eq.s32.totalorder %s15, 1
    %p94 = por %p92, %p93
    %p96 = scmp.ne.s32.totalorder %s81, %s95
    %p97 = scmp.eq.s32.totalorder %s15, 0
    %p98 = por %p96, %p97
    %s99 = ssub.s32 %s16, %s28
    %s100 = ssub.s32 %s17, %s24
    %s101 = sor.u32 %s99, %s100
    %p102 = scmp.eq.s32.totalorder %s101, 0
    %s104 = sadd.s32 %s103, 1
    %s105 = scalar_select %p102, %s103, %s104
    %p108 = pneg %p102
    %p109 = scmp.eq.s32.totalorder %s9, 1
    %p110 = por %p108, %p109
    %p111 = scmp.ne.s32.totalorder %s103, %s106
    %p112 = scmp.eq.s32.totalorder %s9, 0
    %p113 = por %p111, %p112
    %p114 = scmp.ne.s32.totalorder %s103, %s106
    %p115 = scmp.eq.s32.totalorder %s14, 1
    %p116 = por %p114, %p115
    %p117 = scmp.ne.s32.totalorder %s106, %s107
    %p118 = scmp.eq.s32.totalorder %s14, 0
    %p119 = por %p117, %p118
    %p120 = scmp.ne.s32.totalorder %s106, %s107
    %p121 = scmp.eq.s32.totalorder %s15, 1
    %p122 = por %p120, %p121
    %p124 = scmp.ne.s32.totalorder %s107, %s123
    %p125 = scmp.eq.s32.totalorder %s15, 0
    %p126 = por %p124, %p125
    %p127 = scmp.le.s32.totalorder 1, %s9
    %p128 = scmp.lt.s32.totalorder %s9, 3
    %p129 = pnand %p127, %p128
    %p130 = pneg %p129
    // Predicated region
    $region9: #{upblock_forward.1} parent=5 // pred_check
      _
    $region10: #{upblock_forward.1} parent=5 // pred_check_branch
      %132 = sbr.rel (%p129) target = $region12
    $region11: #{upblock_forward.1} parent=5 // pred_region
      %s133 = ssub.s32 %s9, 1
      // Predicated region
      $region13: #{upblock_forward.1} parent=11 // pred_check
        %p134 = pneg %p70
      $region14: #{upblock_forward.1} parent=11 // pred_check_branch
        %136 = sbr.rel (%p134) target = $region16
      $region15: #{upblock_forward.1} parent=11 // pred_region
        _
      $region16: #{upblock_forward.1} parent=11 // pred_fallthru
        _
      // Predicated region
      $region17: #{upblock_forward.1} parent=11 // pred_check
        %p137 = pneg %p91
      $region18: #{upblock_forward.1} parent=11 // pred_check_branch
        %139 = sbr.rel (%p137) target = $region20
      $region19: #{upblock_forward.1} parent=11 // pred_region
        _
      $region20: #{upblock_forward.1} parent=11 // pred_fallthru
        _
    $region12: #{upblock_forward.1} parent=5 // pred_fallthru
      _
    %p140 = scmp.lt.s32.totalorder %s9, 2
    // Predicated region
    $region21: #{upblock_forward.1} parent=5 // pred_check
      %p141 = pneg %p140
    $region22: #{upblock_forward.1} parent=5 // pred_check_branch
      %143 = sbr.rel (%p141) target = $region24
    $region23: #{upblock_forward.1} parent=5 // pred_region
      // Predicated region
      $region25: #{upblock_forward.1} parent=23 // pred_check
        %p144 = pneg %p43
      $region26: #{upblock_forward.1} parent=23 // pred_check_branch
        %146 = sbr.rel (%p144) target = $region28
      $region27: #{upblock_forward.1} parent=23 // pred_region
        %s147 = smul.u32 2, %s17
        %p148 = scmp.lt.s32.totalorder %s16, 1
        %s149 = scalar_select %p148, %s16, 1
        %p150 = scmp.lt.s32.totalorder %s147, 1
        %s151 = scalar_select %p150, %s147, 1
        %s152 = smul.addr %s149, 2
        %s153 = sadd.s32 %s151, %s152
        %s154 = smul.addr %s153, 4
        %s155 = scalar_lea.vmem %s0, %s154
        %s156 = smul.u32 2, %s17
      $region28: #{upblock_forward.1} parent=23 // pred_fallthru
        _
    $region24: #{upblock_forward.1} parent=5 // pred_fallthru
      _
    %p157 = scmp.le.s32.totalorder 1, %s9
    %p158 = scmp.lt.s32.totalorder %s9, 3
    %p159 = pnand %p157, %p158
    %p160 = pneg %p159
    // Predicated region
    $region29: #{upblock_forward.1} parent=5 // pred_check
      _
    $region30: #{upblock_forward.1} parent=5 // pred_check_branch
      %162 = sbr.rel (%p159) target = $region32
    $region31: #{upblock_forward.1} parent=5 // pred_region
      %s163 = ssub.s32 %s9, 1
      %s164 = smul.u32 2, %s19
      %p165 = scmp.lt.s32.totalorder %s18, 1
      %s166 = scalar_select %p165, %s18, 1
      %p167 = scmp.lt.s32.totalorder %s164, 1
      %s168 = scalar_select %p167, %s164, 1
      %s169 = smul.addr %s166, 2
      %s170 = sadd.s32 %s168, %s169
      %s171 = smul.addr %s170, 4
      %s172 = scalar_lea.vmem %s0, %s171
      %p173 = pneg %p49
      %p174 = pneg %p46
      %p175 = pneg %p70
      %p176 = pneg %p67
      %p177 = pneg %p91
      %p178 = pneg %p88
      %p179 = pneg %p119
      %p180 = pneg %p116
      %s181 = smul.u32 2, %s19
      %p182 = scmp.lt.s32.totalorder %s18, 1
      %s183 = scalar_select %p182, %s18, 1
      %p184 = scmp.lt.s32.totalorder %s181, 1
      %s185 = scalar_select %p184, %s181, 1
      %s186 = smul.addr %s183, 2
      %s187 = sadd.s32 %s185, %s186
      %s188 = smul.addr %s187, 8
      %s189 = scalar_lea.vmem %s3, %s188
      %s190 = smul.u32 2, %s19
      %p191 = scmp.lt.s32.totalorder %s18, 1
      %s192 = scalar_select %p191, %s18, 1
      %p193 = scmp.lt.s32.totalorder %s190, 1
      %s194 = scalar_select %p193, %s190, 1
      %s195 = smul.addr %s192, 2
      %s196 = sadd.s32 %s194, %s195
      %s197 = smul.addr %s196, 4
      %s198 = scalar_lea.vmem %s0, %s197
      %s199 = smul.u32 2, %s19
      %s200 = smul.u32 2, %s19
      %p201 = scmp.lt.s32.totalorder %s18, 1
      %s202 = scalar_select %p201, %s18, 1
      %p203 = scmp.lt.s32.totalorder %s200, 1
      %s204 = scalar_select %p203, %s200, 1
      %s205 = smul.addr %s202, 2
      %s206 = sadd.s32 %s204, %s205
      %s207 = smul.addr %s206, 8
      %s208 = scalar_lea.vmem %s3, %s207
      %s209 = smul.u32 2, %s19
      %v210 = vld [vmem:[%s198] sm:$0xff]
      %v211 = vld [vmem:[%s1] sm:$0xff]
      %213 = vset.pattern.permute.xlu0 0
      %214 = vperm.xlu0 %213, %v211
      %v215 = vpop.permute.xlu0 %214
      %v218 = vperm.slane %v210, 0
      %v219 = vperm.slane %v210, 4
      %v222 = vperm.slane %v218, 0
      %v223 = vperm.slane %v219, 0
      %v224 = vmul.f32 %v215, %v222
      %v225 = vmul.f32 %v215, %v223
      %226 = vset.pattern.permute.xlu0 1
      %227 = vperm.xlu0 %226, %v211
      %v228 = vpop.permute.xlu0 %227
      %v230 = vperm.slane %v210, 1
      %v231 = vperm.slane %v210, 5
      %v234 = vperm.slane %v230, 1
      %v235 = vperm.slane %v231, 1
      %v236 = vmul.f32 %v228, %v234
      %v237 = vmul.f32 %v228, %v235
      %v238 = vadd.f32 %v224, %v236
      %v239 = vadd.f32 %v225, %v237
      %240 = vset.pattern.permute.xlu0 2
      %241 = vperm.xlu0 %240, %v211
      %v242 = vpop.permute.xlu0 %241
      %v244 = vperm.slane %v210, 2
      %v245 = vperm.slane %v210, 6
      %v248 = vperm.slane %v244, 2
      %v249 = vperm.slane %v245, 2
      %v250 = vmul.f32 %v242, %v248
      %v251 = vmul.f32 %v242, %v249
      %v252 = vadd.f32 %v238, %v250
      %v253 = vadd.f32 %v239, %v251
      %254 = vset.pattern.permute.xlu0 3
      %255 = vperm.xlu0 %254, %v211
      %v256 = vpop.permute.xlu0 %255
      %v258 = vperm.slane %v210, 3
      %v259 = vperm.slane %v210, 7
      %v262 = vperm.slane %v258, 3
      %v263 = vperm.slane %v259, 3
      %v264 = vmul.f32 %v256, %v262
      %v265 = vmul.f32 %v256, %v263
      %v266 = vadd.f32 %v252, %v264
      %v267 = vadd.f32 %v253, %v265
      %v268 = vld [vmem:[%s2] sm:$0xff]
      %270 = vset.pattern.permute.xlu0 0
      %271 = vperm.xlu0 %270, %v268
      %v272 = vpop.permute.xlu0 %271
      %v274 = vadd.f32 %v266, %v272
      %v275 = vadd.f32 %v267, %v272
      %276 = vst [vmem:[%s208] sm:$0xff] %v274
      %277 = vst [vmem:[%s208 + $0x8] sm:$0xff] %v275
      %s278 = smul.u32 2, %s19
      %p279 = scmp.lt.s32.totalorder %s18, 1
      %s280 = scalar_select %p279, %s18, 1
      %p281 = scmp.lt.s32.totalorder %s278, 1
      %s282 = scalar_select %p281, %s278, 1
      %s283 = smul.addr %s280, 2
      %s284 = sadd.s32 %s282, %s283
      %s285 = smul.addr %s284, 8
      %s286 = scalar_lea.vmem %s3, %s285
      // Predicated region
      $region33: #{upblock_forward.1} parent=31 // pred_check
        %p287 = pneg %p116
      $region34: #{upblock_forward.1} parent=31 // pred_check_branch
        %289 = sbr.rel (%p287) target = $region36
      $region35: #{upblock_forward.1} parent=31 // pred_region
        %s290 = smul.u32 2, %s19
      $region36: #{upblock_forward.1} parent=31 // pred_fallthru
        _
    $region32: #{upblock_forward.1} parent=5 // pred_fallthru
      _
    %p291 = scmp.le.s32.totalorder 2, %s9
    // Predicated region
    $region37: #{upblock_forward.1} parent=5 // pred_check
      %p292 = pneg %p291
    $region38: #{upblock_forward.1} parent=5 // pred_check_branch
      %294 = sbr.rel (%p292) target = $region40
    $region39: #{upblock_forward.1} parent=5 // pred_region
      %s295 = ssub.s32 %s9, 2
      // Predicated region
      $region41: #{upblock_forward.1} parent=39 // pred_check
        %p296 = pneg %p122
      $region42: #{upblock_forward.1} parent=39 // pred_check_branch
        %298 = sbr.rel (%p296) target = $region44
      $region43: #{upblock_forward.1} parent=39 // pred_region
        %s299 = smul.u32 2, %s21
        %p300 = scmp.lt.s32.totalorder %s20, 1
        %s301 = scalar_select %p300, %s20, 1
        %p302 = scmp.lt.s32.totalorder %s299, 1
        %s303 = scalar_select %p302, %s299, 1
        %s304 = smul.addr %s301, 2
        %s305 = sadd.s32 %s303, %s304
        %s306 = smul.addr %s305, 8
        %s307 = scalar_lea.vmem %s3, %s306
      $region44: #{upblock_forward.1} parent=39 // pred_fallthru
        _
    $region40: #{upblock_forward.1} parent=5 // pred_fallthru
      _
  $region6: #{upblock_forward.1} parent=0 // loop_footer
    %s13 = sadd.s32 1, %s9
  $region7: #{upblock_forward.1} parent=0 // loop_footer_branch
    %8 = sbr.rel target = $region3
  $region8: #{upblock_forward.1} parent=0 // loop_exit
    _

</llo_original>
